<compile_context>
chip_gen: v7x
topology: tpu7x:2x2x1
jax: 0.10.0
libtpu: 0.0.40
codegen_flags: <defaults>
</compile_context>

<pallas_src>
import functools

import jax
import jax.numpy as jnp
import numpy as np
from jax.experimental import pallas as pl
from jax.experimental.pallas import tpu as pltpu

LANES = 128
MAX_COLS = 8192                      # cap for the trailing-dim grouping fallback
DEFAULT_TILE_BYTES = 4 * 1024 * 1024  # 4 MiB per input per grid step


def _choose_2d(shape, n):
    """Free (bitcast) 2-D view of the flattened input.

    Lane-dense (n//128, 128) when n is a multiple of 128; otherwise a grouping
    of trailing dims so the last axis equals the full array dim (exempt from
    the (8,128) block rule).  Never pads, never copies.
    """
    if n % LANES == 0:
        return n // LANES, LANES
    cols = 1
    for d in reversed(shape):
        if cols * d > MAX_COLS and cols > 1:
            break
        cols *= d
    return n // cols, cols


def _multi_tensorcore_chip():
    """True only for parts with >1 TensorCore per Pallas device (v4/v5p/v7x)."""
    try:
        kind = jax.devices()[0].device_kind.lower()
    except Exception:
        return False
    return ("v7" in kind) or ("v4" in kind) or ("v5p" in kind)


def _soft_dice_kernel(ps_ref, gt_ref, acc_ref, *, steps_per_split, num_tiles,
                      tile_rows, total_rows, acc_rows, need_mask):
    c = pl.program_id(0)   # stream split ("parallel"): shards across TensorCores
    i = pl.program_id(1)   # streaming reduction axis ("arbitrary")

    @pl.when(i == 0)
    def _():
        acc_ref[...] = jnp.zeros_like(acc_ref)

    def fold(x):
        # (tile_rows, cols) -> (acc_rows, cols).  The reshape only splits the
        # sublane axis on an (8,128) vreg-tile boundary, so it is a layout
        # no-op and the axis-0 sum lowers to plain vreg adds on the VPU.
        r, ccols = x.shape
        if r == acc_rows:
            return x
        return x.reshape(r // acc_rows, acc_rows, ccols).sum(axis=0)

    def accumulate(ps, gt):
        acc_ref[0, 0] += fold(ps * gt)   # partial sum(ps*gt)
        acc_ref[0, 1] += fold(ps + gt)   # partial sum(ps) + sum(gt)

    ps = ps_ref[...].astype(jnp.float32)
    gt = gt_ref[...].astype(jnp.float32)

    if not need_mask:
        accumulate(ps, gt)
    else:
        blk = c * steps_per_split + i
        is_boundary = blk == num_tiles - 1

        @pl.when(jnp.logical_not(is_boundary))
        def _():
            # Steady state: no iota, no selects.
            accumulate(ps, gt)

        @pl.when(is_boundary)
        def _():
            # Only the single ragged last tile pays for the mask.
            row = jax.lax.broadcasted_iota(jnp.int32, ps.shape, 0)
            valid = (row + blk * tile_rows) < total_rows
            accumulate(jnp.where(valid, ps, 0.0), jnp.where(valid, gt, 0.0))


def soft_dice_loss(ps, gt, smooth=1e-5, batch_dice=True, max_tile_bytes=None):
    assert batch_dice, "only batch_dice=True path implemented"
    assert ps.shape == gt.shape
    n_elems = int(ps.size)

    rows, cols = _choose_2d(ps.shape, n_elems)
    ps2d = ps.reshape(rows, cols)   # contiguous reshape: free bitcast, no copy
    gt2d = gt.reshape(rows, cols)

    itemsize = max(ps.dtype.itemsize, gt.dtype.itemsize)
    vmem_cols = ((cols + LANES - 1) // LANES) * LANES   # VMEM pads lanes to 128
    tile_budget = DEFAULT_TILE_BYTES if max_tile_bytes is None else max_tile_bytes
    cap = max(8, (tile_budget // (vmem_cols * itemsize)) // 8 * 8)
    tile_rows = rows if rows <= cap else cap
    num_tiles = pl.cdiv(rows, tile_rows)
    acc_rows = 8 if tile_rows % 8 == 0 else tile_rows
    need_mask = (rows % tile_rows) != 0

    # Shard the stream across TensorCores only where there is more than one per
    # Pallas device; on 1-TC v5e/v6e the split would just add overhead.
    nsplit = 2 if (_multi_tensorcore_chip() and num_tiles >= 4
                   and num_tiles % 2 == 0) else 1
    steps_per_split = num_tiles // nsplit

    kernel = functools.partial(
        _soft_dice_kernel,
        steps_per_split=steps_per_split, num_tiles=num_tiles,
        tile_rows=tile_rows, total_rows=rows, acc_rows=acc_rows,
        need_mask=need_mask)

    in_map = lambda c, i: (c * steps_per_split + i, 0)

    cost = pl.CostEstimate(
        flops=4 * n_elems,
        transcendentals=0,
        bytes_accessed=n_elems * (ps.dtype.itemsize + gt.dtype.itemsize)
        + nsplit * 2 * acc_rows * cols * 4)

    partials = pl.pallas_call(
        kernel,
        out_shape=jax.ShapeDtypeStruct((nsplit, 2, acc_rows, cols), jnp.float32),
        grid_spec=pltpu.PrefetchScalarGridSpec(
            num_scalar_prefetch=0,
            grid=(nsplit, steps_per_split),
            in_specs=[pl.BlockSpec((tile_rows, cols), in_map),
                      pl.BlockSpec((tile_rows, cols), in_map)],
            out_specs=pl.BlockSpec((1, 2, acc_rows, cols),
                                   lambda c, i: (c, 0, 0, 0)),
        ),
        compiler_params=pltpu.CompilerParams(
            # TODO(synk): on v7x, verify the leading "parallel" axis shards
            # across both TensorCores (pltpu.CORE_PARALLEL is the explicit
            # alternative once confirmed to lower on all generations).
            dimension_semantics=("parallel", "arbitrary"),
            vmem_limit_bytes=32 * 1024 * 1024),
        cost_estimate=cost,
    )(ps2d, gt2d)

    s_pg = jnp.sum(partials[:, 0])    # sum(ps*gt)
    s_sum = jnp.sum(partials[:, 1])   # sum(ps) + sum(gt)
    num = 2.0 * s_pg + smooth * float(n_elems)   # torch.sum(2*ps*gt + smooth)
    den = s_sum + smooth
    return -(num / den)


def _reference_f64(ps, gt, smooth=1e-5):
    p = np.asarray(ps, dtype=np.float64)
    g = np.asarray(gt, dtype=np.float64)
    num = np.sum(2.0 * p * g + smooth)
    den = np.sum(g) + np.sum(p) + smooth
    return -(num / den)


if __name__ == "__main__":
    key = jax.random.PRNGKey(0)

    # 5-D NCDHW shapes, as implied by the module's dim=(2,3,4) branch.
    cases = [
        ((2, 4, 8, 16, 16), None),       # lane-aligned, single tile, no mask
        ((1, 3, 7, 24, 40), None),       # N % 128 != 0 -> zero-copy fallback view
        ((2, 4, 17, 32, 32), None),      # larger aligned case, single big tile
        ((2, 4, 17, 32, 32), 64 * 1024), # small tile budget -> multi-tile stream
                                         # with a ragged, masked boundary tile
    ]
    for shape, mtb in cases:
        key, k1, k2 = jax.random.split(key, 3)
        ps = jax.nn.sigmoid(jax.random.normal(k1, shape, dtype=jnp.float32))
        gt = (jax.random.uniform(k2, shape) > 0.5).astype(jnp.float32)

        loss = soft_dice_loss(ps, gt, max_tile_bytes=mtb)
        jax.block_until_ready(loss)

        ref = _reference_f64(ps, gt)
        assert np.allclose(float(loss), ref, rtol=1e-4, atol=1e-6), (
            shape, mtb, float(loss), ref)

    print("KERNEL_OK")
</pallas_src>

<mosaic_0001>
module attributes {stable_mosaic.version = 11 : i64} {
  func.func @_soft_dice_kernel(%arg0: i32, %arg1: i32, %arg2: memref<128x128xf32, #tpu.memory_space<vmem>>, %arg3: memref<128x128xf32, #tpu.memory_space<vmem>>, %arg4: memref<1x2x8x128xf32, #tpu.memory_space<vmem>>) attributes {dimension_semantics = [#tpu.dimension_semantics<parallel>, #tpu.dimension_semantics<arbitrary>], iteration_bounds = array<i64: 1, 1>, scalar_prefetch = 0 : i64, scratch_operands = 0 : i64, tpu.core_type = #tpu.core_type<tc>, window_params = [{transform_indices = @transform_0, window_bounds = array<i64: 128, 128>}, {transform_indices = @transform_1, window_bounds = array<i64: 128, 128>}, {transform_indices = @transform_2, window_bounds = array<i64: 1, 2, 8, 128>}]} {
    %c0_i32 = arith.constant 0 : i32
    %0 = arith.cmpi eq, %arg1, %c0_i32 : i32
    %1 = arith.extui %0 : i1 to i32
    %c0_i32_0 = arith.constant 0 : i32
    %2 = arith.cmpi ne, %1, %c0_i32_0 : i32
    scf.if %2 {
      %cst_20 = arith.constant 0.000000e+00 : f32
      %23 = vector.broadcast %cst_20 : f32 to vector<1x2x8x128xf32>
      %c0_21 = arith.constant 0 : index
      %c0_22 = arith.constant 0 : index
      %c0_23 = arith.constant 0 : index
      %c0_24 = arith.constant 0 : index
      %24 = vector.load %arg4[%c0_21, %c0_22, %c0_23, %c0_24] : memref<1x2x8x128xf32, #tpu.memory_space<vmem>>, vector<1x2x8x128xf32>
      tpu.vector_store %arg4[%c0_21, %c0_22, %c0_23, %c0_24], %23 {strides = array<i32>} : memref<1x2x8x128xf32, #tpu.memory_space<vmem>>, vector<1x2x8x128xf32>,
    } else {
    }
    %c0 = arith.constant 0 : index
    %c0_1 = arith.constant 0 : index
    %3 = vector.load %arg2[%c0, %c0_1] : memref<128x128xf32, #tpu.memory_space<vmem>>, vector<128x128xf32>
    %c0_2 = arith.constant 0 : index
    %c0_3 = arith.constant 0 : index
    %4 = vector.load %arg3[%c0_2, %c0_3] : memref<128x128xf32, #tpu.memory_space<vmem>>, vector<128x128xf32>
    %c0_4 = arith.constant 0 : index
    %c0_5 = arith.constant 0 : index
    %c0_6 = arith.constant 0 : index
    %c0_7 = arith.constant 0 : index
    %5 = vector.load %arg4[%c0_4, %c0_5, %c0_6, %c0_7] : memref<1x2x8x128xf32, #tpu.memory_space<vmem>>, vector<1x1x8x128xf32>
    %6 = vector.shape_cast %5 : vector<1x1x8x128xf32> to vector<8x128xf32>
    %7 = arith.mulf %3, %4 : vector<128x128xf32>
    %8 = vector.shape_cast %7 : vector<128x128xf32> to vector<16x8x128xf32>
    %cst = arith.constant dense<0.000000e+00> : vector<8x128xf32>
    %9 = vector.multi_reduction <add>, %8, %cst [0] : vector<16x8x128xf32> to vector<8x128xf32>
    %10 = arith.addf %6, %9 : vector<8x128xf32>
    %c0_8 = arith.constant 0 : index
    %c0_9 = arith.constant 0 : index
    %c0_10 = arith.constant 0 : index
    %c0_11 = arith.constant 0 : index
    %11 = vector.load %arg4[%c0_8, %c0_9, %c0_10, %c0_11] : memref<1x2x8x128xf32, #tpu.memory_space<vmem>>, vector<1x1x8x128xf32>
    %12 = vector.shape_cast %11 : vector<1x1x8x128xf32> to vector<8x128xf32>
    %13 = vector.shape_cast %10 : vector<8x128xf32> to vector<1x1x8x128xf32>
    tpu.vector_store %arg4[%c0_8, %c0_9, %c0_10, %c0_11], %13 {strides = array<i32>} : memref<1x2x8x128xf32, #tpu.memory_space<vmem>>, vector<1x1x8x128xf32>,
    %c0_12 = arith.constant 0 : index
    %c1 = arith.constant 1 : index
    %c0_13 = arith.constant 0 : index
    %c0_14 = arith.constant 0 : index
    %14 = vector.load %arg4[%c0_12, %c1, %c0_13, %c0_14] : memref<1x2x8x128xf32, #tpu.memory_space<vmem>>, vector<1x1x8x128xf32>
    %15 = vector.shape_cast %14 : vector<1x1x8x128xf32> to vector<8x128xf32>
    %16 = arith.addf %3, %4 : vector<128x128xf32>
    %17 = vector.shape_cast %16 : vector<128x128xf32> to vector<16x8x128xf32>
    %cst_15 = arith.constant dense<0.000000e+00> : vector<8x128xf32>
    %18 = vector.multi_reduction <add>, %17, %cst_15 [0] : vector<16x8x128xf32> to vector<8x128xf32>
    %19 = arith.addf %15, %18 : vector<8x128xf32>
    %c0_16 = arith.constant 0 : index
    %c1_17 = arith.constant 1 : index
    %c0_18 = arith.constant 0 : index
    %c0_19 = arith.constant 0 : index
    %20 = vector.load %arg4[%c0_16, %c1_17, %c0_18, %c0_19] : memref<1x2x8x128xf32, #tpu.memory_space<vmem>>, vector<1x1x8x128xf32>
    %21 = vector.shape_cast %20 : vector<1x1x8x128xf32> to vector<8x128xf32>
    %22 = vector.shape_cast %19 : vector<8x128xf32> to vector<1x1x8x128xf32>
    tpu.vector_store %arg4[%c0_16, %c1_17, %c0_18, %c0_19], %22 {strides = array<i32>} : memref<1x2x8x128xf32, #tpu.memory_space<vmem>>, vector<1x1x8x128xf32>,
    return
  }
  func.func @transform_0(%arg0: i32, %arg1: i32) -> (i32, i32) {
    %c1_i32 = arith.constant 1 : i32
    %0 = arith.muli %arg0, %c1_i32 : i32
    %1 = arith.addi %0, %arg1 : i32
    %c0_i32 = arith.constant 0 : i32
    %c0_i32_0 = arith.constant 0 : i32
    return %1, %c0_i32 : i32, i32
  }
  func.func @transform_1(%arg0: i32, %arg1: i32) -> (i32, i32) {
    %c1_i32 = arith.constant 1 : i32
    %0 = arith.muli %arg0, %c1_i32 : i32
    %1 = arith.addi %0, %arg1 : i32
    %c0_i32 = arith.constant 0 : i32
    %c0_i32_0 = arith.constant 0 : i32
    return %1, %c0_i32 : i32, i32
  }
  func.func @transform_2(%arg0: i32, %arg1: i32) -> (i32, i32, i32, i32) {
    %c0_i32 = arith.constant 0 : i32
    %c0_i32_0 = arith.constant 0 : i32
    %c0_i32_1 = arith.constant 0 : i32
    %c0_i32_2 = arith.constant 0 : i32
    return %arg0, %c0_i32, %c0_i32_0, %c0_i32_1 : i32, i32, i32, i32
  }
}

</mosaic_0001>

<llo_original>
// kernel: tpu_custom_call.1
$region0: #{tpu_custom_call.1}
  #allocation0 [shape = 'u32[]', space=smem, size = 0x4, offset = 0x4, fixed_abs, tag = 'smem constant byte address 0x4 - core index']
  #allocation1 [shape = 'u32[144,128]{1,0:T(1,128)}', space=vmem, size = 0x12000, scoped, tag = 'internal scratch']
  %s0 = inlined_call_operand.hbm [shape: f32[128,128], index: 0, kind: input, shape index: {}]
  %s1 = inlined_call_operand.hbm [shape: f32[128,128], index: 1, kind: input, shape index: {}]
  %s2 = inlined_call_operand.hbm [shape: f32[1,2,8,128], index: 2, kind: output, shape index: {}]
  %s3 = sld [smem:[#allocation0]]
  $region30: #{tpu_custom_call.1} parent=0
    _
  %s5 = ssub.s32 1, %s3
  %s6 = scalar_select 0, %s5, %s3
  $region1: #{tpu_custom_call.1} parent=0
    #allocation2 [shape = 'u8[65536]{0}', space=vmem, size = 0x10000, scoped, tag = 'input window, operand 0, single buffered']
    #allocation3 [shape = 's32[1]{0}', space=sflag, size = 0x4, scoped, tag = 'scoped memory for tpu_custom_call.1']
    #allocation4 [shape = 's32[1]{0}', space=sflag, size = 0x4, scoped, tag = 'scoped memory for tpu_custom_call.1']
    #allocation5 [shape = 'u8[65536]{0}', space=vmem, size = 0x10000, scoped, tag = 'input window, operand 1, single buffered']
    #allocation6 [shape = 's32[1]{0}', space=sflag, size = 0x4, scoped, tag = 'scoped memory for tpu_custom_call.1']
    #allocation7 [shape = 'u8[8192]{0}', space=vmem, size = 0x2000, scoped, tag = 'output window, operand 0, single buffered']
    %7 = vsyncpa [#allocation3], 0
    %8 = vsyncpa [#allocation6], 0
    %9 = vsyncpa [#allocation4], 0
    // Predicated region
    $region2: #{tpu_custom_call.1} parent=1 // pred_check
      _
    $region3: #{tpu_custom_call.1} parent=1 // pred_check_branch
      %11 = sbr.rel (0) target = $region5
    $region4: #{tpu_custom_call.1} parent=1 // pred_region
      %s12 = sadd.s32 0, 0
      %s13 = smul.u32 16, %s12
      %s15 = ssub.s32 2048, 2048
      %16 = vsyncadd [#allocation3], %s15
      %s17 = smul.addr %s13, 128
      %s18 = scalar_lea.hbm %s0, %s17
      %s19 = sshll.u32 [#allocation2], 4
      %s20 = int_to_ptr.vmem [resolvable:$true] %s19
      %25 = dma.hbm_to_vmem [thread:$0]  %s18, 2048, %s20, [#allocation3], 128, 128, 8
    $region5: #{tpu_custom_call.1} parent=1 // pred_fallthru
      _
    // Predicated region
    $region6: #{tpu_custom_call.1} parent=1 // pred_check
      _
    $region7: #{tpu_custom_call.1} parent=1 // pred_check_branch
      %27 = sbr.rel (0) target = $region9
    $region8: #{tpu_custom_call.1} parent=1 // pred_region
      %s28 = sadd.s32 0, 0
      %s29 = smul.u32 16, %s28
      %s31 = ssub.s32 2048, 2048
      %32 = vsyncadd [#allocation6], %s31
      %s33 = smul.addr %s29, 128
      %s34 = scalar_lea.hbm %s1, %s33
      %s35 = sshll.u32 [#allocation5], 4
      %s36 = int_to_ptr.vmem [resolvable:$true] %s35
      %41 = dma.hbm_to_vmem [thread:$0]  %s34, 2048, %s36, [#allocation6], 128, 128, 8
    $region9: #{tpu_custom_call.1} parent=1 // pred_fallthru
      _
    // Predicated region
    $region10: #{tpu_custom_call.1} parent=1 // pred_check
      _
    $region11: #{tpu_custom_call.1} parent=1 // pred_check_branch
      %43 = sbr.rel (0) target = $region13
    $region12: #{tpu_custom_call.1} parent=1 // pred_region
      %44 = dma.done [#allocation3], 2048
    $region13: #{tpu_custom_call.1} parent=1 // pred_fallthru
      _
    // Predicated region
    $region14: #{tpu_custom_call.1} parent=1 // pred_check
      _
    $region15: #{tpu_custom_call.1} parent=1 // pred_check_branch
      %46 = sbr.rel (0) target = $region17
    $region16: #{tpu_custom_call.1} parent=1 // pred_region
      %47 = dma.done [#allocation6], 2048
    $region17: #{tpu_custom_call.1} parent=1 // pred_fallthru
      _
    %s48 = sadd.s32 0, 0
    %s49 = smul.u32 16, %s48
    %s50 = sadd.s32 0, 0
    %s51 = smul.u32 16, %s50
    %p52 = scmp.eq.s32.totalorder 0, 0
    // Predicated region
    $region18: #{tpu_custom_call.1} parent=1 // pred_check
      %p53 = pneg %p52
    $region19: #{tpu_custom_call.1} parent=1 // pred_check_branch
      %55 = sbr.rel (%p53) target = $region21
    $region20: #{tpu_custom_call.1} parent=1 // pred_region
      %56 = vst [vmem:[#allocation7] sm:$0xff] 0.0
      %57 = vst [vmem:[#allocation7 + $0x8] sm:$0xff] 0.0
    $region21: #{tpu_custom_call.1} parent=1 // pred_fallthru
      _
    %v58 = vld [vmem:[#allocation2] sm:$0xff]
    %v59 = vld [vmem:[#allocation2 + $0x8] sm:$0xff]
    %v60 = vld [vmem:[#allocation2 + $0x10] sm:$0xff]
    %v61 = vld [vmem:[#allocation2 + $0x18] sm:$0xff]
    %v62 = vld [vmem:[#allocation2 + $0x20] sm:$0xff]
    %v63 = vld [vmem:[#allocation2 + $0x28] sm:$0xff]
    %v64 = vld [vmem:[#allocation2 + $0x30] sm:$0xff]
    %v65 = vld [vmem:[#allocation2 + $0x38] sm:$0xff]
    %v66 = vld [vmem:[#allocation2 + $0x40] sm:$0xff]
    %v67 = vld [vmem:[#allocation2 + $0x48] sm:$0xff]
    %v68 = vld [vmem:[#allocation2 + $0x50] sm:$0xff]
    %v69 = vld [vmem:[#allocation2 + $0x58] sm:$0xff]
    %v70 = vld [vmem:[#allocation2 + $0x60] sm:$0xff]
    %v71 = vld [vmem:[#allocation2 + $0x68] sm:$0xff]
    %v72 = vld [vmem:[#allocation2 + $0x70] sm:$0xff]
    %v73 = vld [vmem:[#allocation2 + $0x78] sm:$0xff]
    %v74 = vld [vmem:[#allocation5] sm:$0xff]
    %v75 = vld [vmem:[#allocation5 + $0x8] sm:$0xff]
    %v76 = vld [vmem:[#allocation5 + $0x10] sm:$0xff]
    %v77 = vld [vmem:[#allocation5 + $0x18] sm:$0xff]
    %v78 = vld [vmem:[#allocation5 + $0x20] sm:$0xff]
    %v79 = vld [vmem:[#allocation5 + $0x28] sm:$0xff]
    %v80 = vld [vmem:[#allocation5 + $0x30] sm:$0xff]
    %v81 = vld [vmem:[#allocation5 + $0x38] sm:$0xff]
    %v82 = vld [vmem:[#allocation5 + $0x40] sm:$0xff]
    %v83 = vld [vmem:[#allocation5 + $0x48] sm:$0xff]
    %v84 = vld [vmem:[#allocation5 + $0x50] sm:$0xff]
    %v85 = vld [vmem:[#allocation5 + $0x58] sm:$0xff]
    %v86 = vld [vmem:[#allocation5 + $0x60] sm:$0xff]
    %v87 = vld [vmem:[#allocation5 + $0x68] sm:$0xff]
    %v88 = vld [vmem:[#allocation5 + $0x70] sm:$0xff]
    %v89 = vld [vmem:[#allocation5 + $0x78] sm:$0xff]
    %v90 = vld [vmem:[#allocation7] sm:$0xff]
    %v91 = vmul.f32 %v58, %v74
    %v92 = vmul.f32 %v59, %v75
    %v93 = vmul.f32 %v60, %v76
    %v94 = vmul.f32 %v61, %v77
    %v95 = vmul.f32 %v62, %v78
    %v96 = vmul.f32 %v63, %v79
    %v97 = vmul.f32 %v64, %v80
    %v98 = vmul.f32 %v65, %v81
    %v99 = vmul.f32 %v66, %v82
    %v100 = vmul.f32 %v67, %v83
    %v101 = vmul.f32 %v68, %v84
    %v102 = vmul.f32 %v69, %v85
    %v103 = vmul.f32 %v70, %v86
    %v104 = vmul.f32 %v71, %v87
    %v105 = vmul.f32 %v72, %v88
    %v106 = vmul.f32 %v73, %v89
    %v107 = vadd.f32 %v91, %v92
    %v108 = vadd.f32 %v107, %v93
    %v109 = vadd.f32 %v108, %v94
    %v110 = vadd.f32 %v109, %v95
    %v111 = vadd.f32 %v110, %v96
    %v112 = vadd.f32 %v111, %v97
    %v113 = vadd.f32 %v112, %v98
    %v114 = vadd.f32 %v113, %v99
    %v115 = vadd.f32 %v114, %v100
    %v116 = vadd.f32 %v115, %v101
    %v117 = vadd.f32 %v116, %v102
    %v118 = vadd.f32 %v117, %v103
    %v119 = vadd.f32 %v118, %v104
    %v120 = vadd.f32 %v119, %v105
    %v121 = vadd.f32 %v120, %v106
    %v122 = vadd.f32 %v90, %v121
    %123 = vst [vmem:[#allocation7] sm:$0xff] %v122
    %s124 = scalar_lea.vmem [#allocation7], 8
    %v125 = vld [vmem:[%s124] sm:$0xff]
    %v126 = vadd.f32 %v58, %v74
    %v127 = vadd.f32 %v59, %v75
    %v128 = vadd.f32 %v60, %v76
    %v129 = vadd.f32 %v61, %v77
    %v130 = vadd.f32 %v62, %v78
    %v131 = vadd.f32 %v63, %v79
    %v132 = vadd.f32 %v64, %v80
    %v133 = vadd.f32 %v65, %v81
    %v134 = vadd.f32 %v66, %v82
    %v135 = vadd.f32 %v67, %v83
    %v136 = vadd.f32 %v68, %v84
    %v137 = vadd.f32 %v69, %v85
    %v138 = vadd.f32 %v70, %v86
    %v139 = vadd.f32 %v71, %v87
    %v140 = vadd.f32 %v72, %v88
    %v141 = vadd.f32 %v73, %v89
    %v142 = vadd.f32 %v126, %v127
    %v143 = vadd.f32 %v142, %v128
    %v144 = vadd.f32 %v143, %v129
    %v145 = vadd.f32 %v144, %v130
    %v146 = vadd.f32 %v145, %v131
    %v147 = vadd.f32 %v146, %v132
    %v148 = vadd.f32 %v147, %v133
    %v149 = vadd.f32 %v148, %v134
    %v150 = vadd.f32 %v149, %v135
    %v151 = vadd.f32 %v150, %v136
    %v152 = vadd.f32 %v151, %v137
    %v153 = vadd.f32 %v152, %v138
    %v154 = vadd.f32 %v153, %v139
    %v155 = vadd.f32 %v154, %v140
    %v156 = vadd.f32 %v155, %v141
    %v157 = vadd.f32 %v125, %v156
    %158 = vst [vmem:[%s124] sm:$0xff] %v157
    // Predicated region
    $region22: #{tpu_custom_call.1} parent=1 // pred_check
      _
    $region23: #{tpu_custom_call.1} parent=1 // pred_check_branch
      %160 = sbr.rel (0) target = $region25
    $region24: #{tpu_custom_call.1} parent=1 // pred_region
      %s162 = ssub.s32 256, 256
      %163 = vsyncadd [#allocation4], %s162
      %s164 = sshll.u32 [#allocation7], 4
      %s165 = int_to_ptr.vmem [resolvable:$true] %s164
      %170 = dma.vmem_to_hbm [thread:$0]  %s165, 256, %s2, [#allocation4], 128, 128, 8
    $region25: #{tpu_custom_call.1} parent=1 // pred_fallthru
      _
    // Predicated region
    $region26: #{tpu_custom_call.1} parent=1 // pred_check
      _
    $region27: #{tpu_custom_call.1} parent=1 // pred_check_branch
      %172 = sbr.rel (0) target = $region29
    $region28: #{tpu_custom_call.1} parent=1 // pred_region
      %173 = dma.done [#allocation4], 256
    $region29: #{tpu_custom_call.1} parent=1 // pred_fallthru
      _
    %174 = vsyncpa [#allocation3], 1
    %175 = vsyncpa [#allocation6], 1
    %176 = vsyncpa [#allocation4], 1

</llo_original>
